<compile_context>
chip_gen: v6e
topology: v6e:2x2x1
jax: 0.10.0
libtpu: 0.0.40
codegen_flags: <defaults>
</compile_context>

<pallas_src>
import math
import jax
import jax.numpy as jnp
from jax.experimental import pallas as pl
from jax.experimental.pallas import tpu as pltpu


def _round_up(x, m):
    return ((x + m - 1) // m) * m


_SINGLE_K_MAX = 2048   # full-K weight panel stays resident below this
_K_SPLIT_TILE = 1024   # K tile when the reduction must be split


# ---------------------------------------------------------------------------
# Kernels
# ---------------------------------------------------------------------------
def _fc_kernel_single_k(x_ref, w_ref, b_ref, o_ref):
    """Full K resident: one MXU pass, bias fused into the epilogue cast."""
    o_ref[...] = (
        jnp.dot(x_ref[...], w_ref[...], preferred_element_type=jnp.float32)
        + b_ref[...]
    ).astype(o_ref.dtype)


def _fc_kernel_ksplit(x_ref, w_ref, b_ref, o_ref, acc_ref):
    """K-split fallback (very large in_ch): f32 acc seeded with the bias."""
    k = pl.program_id(2)

    @pl.when(k == 0)
    def _():
        # Seed with the broadcast bias -> no extra add in the epilogue.
        acc_ref[...] = jnp.broadcast_to(b_ref[...], acc_ref.shape)

    acc_ref[...] += jnp.dot(
        x_ref[...], w_ref[...], preferred_element_type=jnp.float32
    )

    @pl.when(k == pl.num_programs(2) - 1)
    def _():
        o_ref[...] = acc_ref[...].astype(o_ref.dtype)


# ---------------------------------------------------------------------------
# Parameter preparation (padding hoisted out of the per-call path)
# ---------------------------------------------------------------------------
def prepare_hgnn_fc(w_t, b, *, use_bf16=False):
    """Pick K/P tiling (M-independent) and pre-pad the weight / bias once.

    w_t: [in_ch, out_ch] (transposed nn.Linear weight), b: [out_ch].
    use_bf16: stream x / W in bf16 (f32 accumulation) -- recommended on
              v6e / v7x; halves HBM traffic on v5e too.
    """
    K, P = w_t.shape
    assert b.shape == (P,)
    in_dtype = jnp.bfloat16 if use_bf16 else jnp.float32

    # --- K tiling -----------------------------------------------------------
    Kp = _round_up(K, 128)
    if Kp <= _SINGLE_K_MAX:
        tk = Kp                      # single resident K tile -> no K grid axis
    else:
        tk = _K_SPLIT_TILE
        Kp = _round_up(K, tk)

    # --- out_ch tiling (lane-dense: multiples of 128, no vst.msk) ------------
    Pp = _round_up(P, 128)
    if Pp <= 256:
        tn = 128                     # >=2 parallel tiles when Pp == 256 (v7x 2 TCs)
    elif Pp <= 512:
        tn = Pp
    else:
        tn = 512
        Pp = _round_up(P, tn)

    if (Kp, Pp) == (K, P) and w_t.dtype == in_dtype:
        wp = w_t
    elif (Kp, Pp) == (K, P):
        wp = w_t.astype(in_dtype)
    else:
        wp = jnp.zeros((Kp, Pp), in_dtype).at[:K, :P].set(w_t.astype(in_dtype))
    bp = jnp.zeros((1, Pp), jnp.float32).at[0, :P].set(b.astype(jnp.float32))

    return dict(wp=wp, bp=bp, K=K, P=P, Kp=Kp, Pp=Pp, tk=tk, tn=tn,
                in_dtype=in_dtype)


# ---------------------------------------------------------------------------
# Forward
# ---------------------------------------------------------------------------
def hgnn_fc_apply(params, x):
    """y = x @ w_t + b using pre-prepared (padded) parameters."""
    K, P = params["K"], params["P"]
    Kp, Pp = params["Kp"], params["Pp"]
    tk, tn = params["tk"], params["tn"]
    in_dtype = params["in_dtype"]
    wp, bp = params["wp"], params["bp"]

    M, Kx = x.shape
    assert Kx == K

    # --- adaptive M tiling (minimize padded rows) ----------------------------
    row_align = 16 if in_dtype == jnp.bfloat16 else 8
    if M <= 512:
        tm = _round_up(M, row_align)
    else:
        tm = min((512, 256, 128), key=lambda c: (_round_up(M, c), -c))
    Mp = _round_up(M, tm)

    # Only materialize a padded copy of x when padding is actually required.
    if (Mp, Kp) == (M, K) and x.dtype == in_dtype:
        xp = x
    elif (Mp, Kp) == (M, K):
        xp = x.astype(in_dtype)
    else:
        xp = jnp.zeros((Mp, Kp), in_dtype).at[:M, :K].set(x.astype(in_dtype))

    out_dtype = x.dtype
    single_k = (Kp == tk)
    itemsize = jnp.dtype(in_dtype).itemsize

    # Double-buffered working-set estimate -> explicit scoped-VMEM limit.
    # (v5e default scoped limit is only 16 MiB; stay well under v7x's 64 MiB.)
    ws = 2 * (tm * tk + tk * tn) * itemsize + 2 * (tm * tn + tn) * 4
    if not single_k:
        ws += tm * tn * 4
    vmem_limit = int(min(48 << 20, max(32 << 20, 2 * ws)))

    cost = pl.CostEstimate(
        flops=2 * Mp * Kp * Pp,
        transcendentals=0,
        bytes_accessed=(Mp * Kp * itemsize          # x read
                        + Kp * Pp * itemsize        # W read (stationary)
                        + Pp * 4                    # bias read
                        + Mp * Pp * jnp.dtype(out_dtype).itemsize),  # y write
    )

    if single_k:
        grid = (Mp // tm, Pp // tn)
        out = pl.pallas_call(
            _fc_kernel_single_k,
            out_shape=jax.ShapeDtypeStruct((Mp, Pp), out_dtype),
            grid_spec=pltpu.PrefetchScalarGridSpec(
                num_scalar_prefetch=0,
                grid=grid,
                in_specs=[
                    # x tile follows the M index only (no re-DMA across j).
                    pl.BlockSpec((tm, Kp), lambda i, j: (i, 0)),
                    # Full-K weight panel; ignores i -> stationary across M
                    # tiles, re-DMA'd only when the out_ch tile changes.
                    pl.BlockSpec((Kp, tn), lambda i, j: (0, j)),
                    pl.BlockSpec((1, tn), lambda i, j: (0, j)),
                ],
                out_specs=pl.BlockSpec((tm, tn), lambda i, j: (i, j)),
            ),
            compiler_params=pltpu.CompilerParams(
                dimension_semantics=("parallel", "parallel"),
                vmem_limit_bytes=vmem_limit,
            ),
            cost_estimate=cost,
        )(xp, wp, bp)
    else:
        grid = (Mp // tm, Pp // tn, Kp // tk)
        out = pl.pallas_call(
            _fc_kernel_ksplit,
            out_shape=jax.ShapeDtypeStruct((Mp, Pp), out_dtype),
            grid_spec=pltpu.PrefetchScalarGridSpec(
                num_scalar_prefetch=0,
                grid=grid,
                in_specs=[
                    pl.BlockSpec((tm, tk), lambda i, j, k: (i, k)),
                    pl.BlockSpec((tk, tn), lambda i, j, k: (k, j)),
                    pl.BlockSpec((1, tn), lambda i, j, k: (0, j)),
                ],
                # Same output block across K -> accumulator stays resident.
                out_specs=pl.BlockSpec((tm, tn), lambda i, j, k: (i, j)),
                scratch_shapes=[pltpu.VMEM((tm, tn), jnp.float32)],
            ),
            compiler_params=pltpu.CompilerParams(
                dimension_semantics=("parallel", "parallel", "arbitrary"),
                vmem_limit_bytes=vmem_limit,
            ),
            cost_estimate=cost,
        )(xp, wp, bp)

    if (Mp, Pp) == (M, P):
        return out
    return out[:M, :P]


def hgnn_fc_forward(x, w_t, b, *, use_bf16=False):
    """Convenience one-shot wrapper (prepare + apply)."""
    return hgnn_fc_apply(prepare_hgnn_fc(w_t, b, use_bf16=use_bf16), x)


def init_hgnn_fc_params(key, in_ch, out_ch):
    """Deterministic init matching nn.Linear shapes (kaiming-uniform-like)."""
    k_w, k_b = jax.random.split(key)
    bound = 1.0 / math.sqrt(in_ch)
    # torch stores weight as [out_ch, in_ch]; we keep the transpose [in_ch, out_ch].
    w_t = jax.random.uniform(k_w, (in_ch, out_ch), jnp.float32, -bound, bound)
    b = jax.random.uniform(k_b, (out_ch,), jnp.float32, -bound, bound)
    return w_t, b


if __name__ == "__main__":
    key = jax.random.PRNGKey(0)
    k_x, k_p, k_x2, k_p2, k_x3, k_p3 = jax.random.split(key, 6)

    # --- small demo shape consistent with HGNN's final FC --------------------
    N, in_ch, out_ch = 8, 32, 16
    x = jax.random.normal(k_x, (N, in_ch), jnp.float32)
    w_t, b = init_hgnn_fc_params(k_p, in_ch, out_ch)

    y = hgnn_fc_forward(x, w_t, b)
    jax.block_until_ready(y)
    y_ref = jnp.dot(x, w_t, precision=jax.lax.Precision.HIGHEST) + b
    assert y.shape == (N, out_ch)
    assert jnp.allclose(y, y_ref, atol=1e-4, rtol=1e-4)

    # --- larger, non-aligned shape: single-K path, M/P tiling + padding ------
    N2, in2, out2 = 300, 1024, 200
    x2 = jax.random.normal(k_x2, (N2, in2), jnp.float32)
    w2, b2 = init_hgnn_fc_params(k_p2, in2, out2)

    params2 = prepare_hgnn_fc(w2, b2)          # weight/bias padded once
    y2 = hgnn_fc_apply(params2, x2)
    jax.block_until_ready(y2)
    y2_ref = jnp.dot(x2, w2, precision=jax.lax.Precision.HIGHEST) + b2
    assert y2.shape == (N2, out2)
    assert jnp.allclose(y2, y2_ref, atol=2e-3, rtol=2e-3)

    # --- very large in_ch: exercises the K-split fallback --------------------
    N3, in3, out3 = 32, 4096, 100
    x3 = jax.random.normal(k_x3, (N3, in3), jnp.float32)
    w3, b3 = init_hgnn_fc_params(k_p3, in3, out3)

    y3 = hgnn_fc_forward(x3, w3, b3)
    jax.block_until_ready(y3)
    y3_ref = jnp.dot(x3, w3, precision=jax.lax.Precision.HIGHEST) + b3
    assert y3.shape == (N3, out3)
    assert jnp.allclose(y3, y3_ref, atol=4e-3, rtol=4e-3)

    print("KERNEL_OK")
</pallas_src>

<mosaic_0001>
module attributes {stable_mosaic.version = 11 : i64} {
  func.func @_fc_kernel_single_k(%arg0: i32, %arg1: i32, %arg2: memref<8x128xf32, #tpu.memory_space<vmem>>, %arg3: memref<128x128xf32, #tpu.memory_space<vmem>>, %arg4: memref<1x128xf32, #tpu.memory_space<vmem>>, %arg5: memref<8x128xf32, #tpu.memory_space<vmem>>) attributes {dimension_semantics = [#tpu.dimension_semantics<parallel>, #tpu.dimension_semantics<parallel>], iteration_bounds = array<i64: 1, 1>, scalar_prefetch = 0 : i64, scratch_operands = 0 : i64, tpu.core_type = #tpu.core_type<tc>, window_params = [{transform_indices = @transform_0, window_bounds = array<i64: 8, 128>}, {transform_indices = @transform_1, window_bounds = array<i64: 128, 128>}, {transform_indices = @transform_2, window_bounds = array<i64: 1, 128>}, {transform_indices = @transform_3, window_bounds = array<i64: 8, 128>}]} {
    %c0 = arith.constant 0 : index
    %c0_0 = arith.constant 0 : index
    %0 = vector.load %arg2[%c0, %c0_0] : memref<8x128xf32, #tpu.memory_space<vmem>>, vector<8x128xf32>
    %c0_1 = arith.constant 0 : index
    %c0_2 = arith.constant 0 : index
    %1 = vector.load %arg3[%c0_1, %c0_2] : memref<128x128xf32, #tpu.memory_space<vmem>>, vector<128x128xf32>
    %cst = arith.constant dense<0.000000e+00> : vector<8x128xf32>
    %2 = tpu.matmul %0, %1, %cst {dimension_numbers = #tpu.dot_dimension_numbers<[1], [0], [0], [1], [0, 0, 1, 1], [], []>} : vector<8x128xf32>, vector<128x128xf32>, vector<8x128xf32> -> vector<8x128xf32>
    %c0_3 = arith.constant 0 : index
    %c0_4 = arith.constant 0 : index
    %3 = vector.load %arg4[%c0_3, %c0_4] : memref<1x128xf32, #tpu.memory_space<vmem>>, vector<1x128xf32>
    %4 = vector.broadcast %3 : vector<1x128xf32> to vector<8x128xf32>
    %5 = arith.addf %2, %4 : vector<8x128xf32>
    %c0_5 = arith.constant 0 : index
    %c0_6 = arith.constant 0 : index
    %6 = vector.load %arg5[%c0_5, %c0_6] : memref<8x128xf32, #tpu.memory_space<vmem>>, vector<8x128xf32>
    tpu.vector_store %arg5[%c0_5, %c0_6], %5 {strides = array<i32>} : memref<8x128xf32, #tpu.memory_space<vmem>>, vector<8x128xf32>,
    return
  }
  func.func @transform_0(%arg0: i32, %arg1: i32) -> (i32, i32) {
    %c0_i32 = arith.constant 0 : i32
    %c0_i32_0 = arith.constant 0 : i32
    return %arg0, %c0_i32 : i32, i32
  }
  func.func @transform_1(%arg0: i32, %arg1: i32) -> (i32, i32) {
    %c0_i32 = arith.constant 0 : i32
    %c0_i32_0 = arith.constant 0 : i32
    return %c0_i32, %arg1 : i32, i32
  }
  func.func @transform_2(%arg0: i32, %arg1: i32) -> (i32, i32) {
    %c0_i32 = arith.constant 0 : i32
    %c0_i32_0 = arith.constant 0 : i32
    return %c0_i32, %arg1 : i32, i32
  }
  func.func @transform_3(%arg0: i32, %arg1: i32) -> (i32, i32) {
    %c0_i32 = arith.constant 0 : i32
    return %arg0, %arg1 : i32, i32
  }
}

</mosaic_0001>

<llo_original>
// kernel: tpu_custom_call.1
$region0: #{tpu_custom_call.1}
  #allocation0 [shape = 'u32[]', space=smem, size = 0x4, offset = 0x4, fixed_abs, tag = 'smem constant byte address 0x4 - core index']
  #allocation1 [shape = 'u32[144,128]{1,0:T(1,128)}', space=vmem, size = 0x12000, scoped, tag = 'internal scratch']
  %s0 = inlined_call_operand.hbm [shape: f32[8,128], index: 0, kind: input, shape index: {}]
  %s1 = inlined_call_operand.hbm [shape: f32[128,128], index: 1, kind: input, shape index: {}]
  %s2 = inlined_call_operand.vmem [shape: f32[1,128], index: 2, kind: input, shape index: {}]
  %s3 = inlined_call_operand.hbm [shape: f32[8,128], index: 3, kind: output, shape index: {}]
  %s4 = sld [smem:[#allocation0]]
  $region30: #{tpu_custom_call.1} parent=0
    _
  %s6 = ssub.s32 1, %s4
  %s7 = scalar_select 0, %s6, %s4
  $region1: #{tpu_custom_call.1} parent=0
    #allocation2 [shape = 'u8[4096]{0}', space=vmem, size = 0x1000, scoped, tag = 'input window, operand 0, single buffered']
    #allocation3 [shape = 's32[1]{0}', space=sflag, size = 0x4, scoped, tag = 'scoped memory for tpu_custom_call.1']
    #allocation4 [shape = 's32[1]{0}', space=sflag, size = 0x4, scoped, tag = 'scoped memory for tpu_custom_call.1']
    #allocation5 [shape = 'u8[65536]{0}', space=vmem, size = 0x10000, scoped, tag = 'input window, operand 1, single buffered']
    #allocation6 [shape = 's32[1]{0}', space=sflag, size = 0x4, scoped, tag = 'scoped memory for tpu_custom_call.1']
    #allocation7 [shape = 'u8[4096]{0}', space=vmem, size = 0x1000, scoped, tag = 'output window, operand 0, single buffered']
    %8 = vsyncpa [#allocation3], 0
    %9 = vsyncpa [#allocation6], 0
    %10 = vsyncpa [#allocation4], 0
    // Predicated region
    $region2: #{tpu_custom_call.1} parent=1 // pred_check
      _
    $region3: #{tpu_custom_call.1} parent=1 // pred_check_branch
      %12 = sbr.rel (0) target = $region5
    $region4: #{tpu_custom_call.1} parent=1 // pred_region
      %s14 = ssub.s32 128, 128
      %15 = vsyncadd [#allocation3], %s14
      %s17 = sshll.u32 [#allocation2], 4
      %s18 = int_to_ptr.vmem [resolvable:$true] %s17
      %20 = dma.hbm_to_vmem [thread:$0]  %s0, 128, %s18, [#allocation3]
    $region5: #{tpu_custom_call.1} parent=1 // pred_fallthru
      _
    // Predicated region
    $region6: #{tpu_custom_call.1} parent=1 // pred_check
      _
    $region7: #{tpu_custom_call.1} parent=1 // pred_check_branch
      %22 = sbr.rel (0) target = $region9
    $region8: #{tpu_custom_call.1} parent=1 // pred_region
      %s24 = ssub.s32 2048, 2048
      %25 = vsyncadd [#allocation6], %s24
      %s26 = sshll.u32 [#allocation5], 4
      %s27 = int_to_ptr.vmem [resolvable:$true] %s26
      %32 = dma.hbm_to_vmem [thread:$0]  %s1, 2048, %s27, [#allocation6], 128, 128, 8
    $region9: #{tpu_custom_call.1} parent=1 // pred_fallthru
      _
    // Predicated region
    $region10: #{tpu_custom_call.1} parent=1 // pred_check
      _
    $region11: #{tpu_custom_call.1} parent=1 // pred_check_branch
      %34 = sbr.rel (0) target = $region13
    $region12: #{tpu_custom_call.1} parent=1 // pred_region
      _
    $region13: #{tpu_custom_call.1} parent=1 // pred_fallthru
      _
    // Predicated region
    $region14: #{tpu_custom_call.1} parent=1 // pred_check
      _
    $region15: #{tpu_custom_call.1} parent=1 // pred_check_branch
      %36 = sbr.rel (0) target = $region17
    $region16: #{tpu_custom_call.1} parent=1 // pred_region
      %37 = dma.done [#allocation3], 128
    $region17: #{tpu_custom_call.1} parent=1 // pred_fallthru
      _
    // Predicated region
    $region18: #{tpu_custom_call.1} parent=1 // pred_check
      _
    $region19: #{tpu_custom_call.1} parent=1 // pred_check_branch
      %39 = sbr.rel (0) target = $region21
    $region20: #{tpu_custom_call.1} parent=1 // pred_region
      %40 = dma.done [#allocation6], 2048
    $region21: #{tpu_custom_call.1} parent=1 // pred_fallthru
      _
    %v41 = vld [vmem:[#allocation2] sm:$0xff]
    %v42 = vld [vmem:[#allocation5] sm:$0xff]
    %v43 = vld [vmem:[#allocation5 + $0x8] sm:$0xff]
    %v44 = vld [vmem:[#allocation5 + $0x10] sm:$0xff]
    %v45 = vld [vmem:[#allocation5 + $0x18] sm:$0xff]
    %v46 = vld [vmem:[#allocation5 + $0x20] sm:$0xff]
    %v47 = vld [vmem:[#allocation5 + $0x28] sm:$0xff]
    %v48 = vld [vmem:[#allocation5 + $0x30] sm:$0xff]
    %v49 = vld [vmem:[#allocation5 + $0x38] sm:$0xff]
    %v50 = vld [vmem:[#allocation5 + $0x40] sm:$0xff]
    %v51 = vld [vmem:[#allocation5 + $0x48] sm:$0xff]
    %v52 = vld [vmem:[#allocation5 + $0x50] sm:$0xff]
    %v53 = vld [vmem:[#allocation5 + $0x58] sm:$0xff]
    %v54 = vld [vmem:[#allocation5 + $0x60] sm:$0xff]
    %v55 = vld [vmem:[#allocation5 + $0x68] sm:$0xff]
    %v56 = vld [vmem:[#allocation5 + $0x70] sm:$0xff]
    %v57 = vld [vmem:[#allocation5 + $0x78] sm:$0xff]
    %v58 = vld [vmem:[%s2] sm:$0x1]
    %v60 = vlaneseq
    %v61 = vshrl.u32 %v60, 7
    %v62 = vsub.s32 0, %v61
    %v63 = vrot.slane %v58, %v62
    %65 = vmatprep.subr.mxu0 0.0
    %66 = vmatpush1.msra.mxu0 %v57
    %67 = vmatprep.subr.mxu0 0.0
    %68 = vmatpush1.msra.mxu0 %v56
    %69 = vmatprep.subr.mxu0 0.0
    %70 = vmatpush1.msra.mxu0 %v55
    %71 = vmatprep.subr.mxu0 0.0
    %72 = vmatpush1.msra.mxu0 %v54
    %73 = vmatprep.subr.mxu0 0.0
    %74 = vmatpush1.msra.mxu0 %v53
    %75 = vmatprep.subr.mxu0 0.0
    %76 = vmatpush1.msra.mxu0 %v52
    %77 = vmatprep.subr.mxu0 0.0
    %78 = vmatpush1.msra.mxu0 %v51
    %79 = vmatprep.subr.mxu0 0.0
    %80 = vmatpush1.msra.mxu0 %v50
    %81 = vmatprep.subr.mxu0 0.0
    %82 = vmatpush1.msra.mxu0 %v49
    %83 = vmatprep.subr.mxu0 0.0
    %84 = vmatpush1.msra.mxu0 %v48
    %85 = vmatprep.subr.mxu0 0.0
    %86 = vmatpush1.msra.mxu0 %v47
    %87 = vmatprep.subr.mxu0 0.0
    %88 = vmatpush1.msra.mxu0 %v46
    %89 = vmatprep.subr.mxu0 0.0
    %90 = vmatpush1.msra.mxu0 %v45
    %91 = vmatprep.subr.mxu0 0.0
    %92 = vmatpush1.msra.mxu0 %v44
    %93 = vmatprep.subr.mxu0 0.0
    %94 = vmatpush1.msra.mxu0 %v43
    %95 = vmatprep.subr.mxu0 0.0
    %96 = vmatpush1.msra.mxu0 %v42
    %97 = vmatprep.subr.mxu0 0.0
    %98 = vmatpush2.msra.mxu0 0.0
    %99 = vmatprep.subr.mxu0 0.0
    %100 = vmatpush2.msra.mxu0 0.0
    %101 = vmatprep.subr.mxu0 0.0
    %102 = vmatpush2.msra.mxu0 0.0
    %103 = vmatprep.subr.mxu0 0.0
    %104 = vmatpush2.msra.mxu0 0.0
    %105 = vmatprep.subr.mxu0 0.0
    %106 = vmatpush2.msra.mxu0 0.0
    %107 = vmatprep.subr.mxu0 0.0
    %108 = vmatpush2.msra.mxu0 0.0
    %109 = vmatprep.subr.mxu0 0.0
    %110 = vmatpush2.msra.mxu0 0.0
    %111 = vmatprep.subr.mxu0 0.0
    %112 = vmatpush2.msra.mxu0 0.0
    %113 = vmatprep.subr.mxu0 0.0
    %114 = vmatpush2.msra.mxu0 0.0
    %115 = vmatprep.subr.mxu0 0.0
    %116 = vmatpush2.msra.mxu0 0.0
    %117 = vmatprep.subr.mxu0 0.0
    %118 = vmatpush2.msra.mxu0 0.0
    %119 = vmatprep.subr.mxu0 0.0
    %120 = vmatpush2.msra.mxu0 0.0
    %121 = vmatprep.subr.mxu0 0.0
    %122 = vmatpush2.msra.mxu0 0.0
    %123 = vmatprep.subr.mxu0 0.0
    %124 = vmatpush2.msra.mxu0 0.0
    %125 = vmatprep.subr.mxu0 0.0
    %126 = vmatpush2.msra.mxu0 0.0
    %127 = vmatprep.subr.mxu0 0.0
    %128 = vmatpush2.msra.mxu0 0.0
    %129 = vmatprep.mubr.f32.mxu0 0.0
    %130 = vmatmul.mubr.f32.gmra.mxu0 %v41
    %v131 = vpop.f32.mrf.mxu0
    %v132 = vadd.f32 %v63, %v131
    %v133 = vpop.f32.mrf.mxu0
    %134 = vdwg.mxu0
    %135 = vst [vmem:[#allocation7] sm:$0xff] %v132
    // Predicated region
    $region22: #{tpu_custom_call.1} parent=1 // pred_check
      _
    $region23: #{tpu_custom_call.1} parent=1 // pred_check_branch
      %137 = sbr.rel (0) target = $region25
    $region24: #{tpu_custom_call.1} parent=1 // pred_region
      %s139 = ssub.s32 128, 128
      %140 = vsyncadd [#allocation4], %s139
      %s142 = sshll.u32 [#allocation7], 4
      %s143 = int_to_ptr.vmem [resolvable:$true] %s142
      %145 = dma.vmem_to_hbm [thread:$0]  %s143, 128, %s3, [#allocation4]
    $region25: #{tpu_custom_call.1} parent=1 // pred_fallthru
      _
    // Predicated region
    $region26: #{tpu_custom_call.1} parent=1 // pred_check
      _
    $region27: #{tpu_custom_call.1} parent=1 // pred_check_branch
      %147 = sbr.rel (0) target = $region29
    $region28: #{tpu_custom_call.1} parent=1 // pred_region
      %148 = dma.done [#allocation4], 128
    $region29: #{tpu_custom_call.1} parent=1 // pred_fallthru
      _
    %149 = vsyncpa [#allocation3], 1
    %150 = vsyncpa [#allocation6], 1
    %151 = vsyncpa [#allocation4], 1

</llo_original>
